<compile_context>
chip_gen: v7x
topology: tpu7x:2x2x1
jax: 0.10.0
libtpu: 0.0.40
codegen_flags: <defaults>
</compile_context>

<pallas_src>
import functools

import jax
import jax.numpy as jnp
from jax.experimental import pallas as pl
from jax.experimental.pallas import tpu as pltpu

_LANE = 128                 # pad all channel dims to multiples of this
_TILE = 512                 # preferred A row/K tile (HBM-bound stream)
_MIN_TILE = 256             # MXU-shaped fallback tile for small graphs
_XW_RESIDENT_BYTES = 4 * 1024 * 1024       # keep XW VMEM-resident below this
_VMEM_LIMIT = 40 * 1024 * 1024             # safe on v7x (64 MiB) and v5e/v6e


# ----------------------------------------------------------------------------
# Pallas kernel: GCN aggregation   out = A_hat @ XW + b  [+ ReLU]
# ----------------------------------------------------------------------------
def _gcn_agg_kernel(a_ref, xw_ref, b_ref, out_ref, *maybe_acc,
                    apply_relu, xw_resident, tk, acc_in_out):
    # f32-output layers accumulate straight into the (resident-across-k) out
    # block; bf16-output layers use the f32 scratch accumulator.
    acc_ref = out_ref if acc_in_out else maybe_acc[0]
    k = pl.program_id(1)

    @pl.when(k == 0)
    def _():
        acc_ref[...] = jnp.zeros_like(acc_ref)

    if xw_resident:
        # Whole (N_p, Cout) XW lives in VMEM; slice the k-th row tile.
        start = pl.multiple_of(k * tk, tk)
        xw = xw_ref[pl.ds(start, tk), :]
    else:
        xw = xw_ref[...]

    acc_ref[...] += jnp.dot(a_ref[...], xw, preferred_element_type=jnp.float32)

    @pl.when(k == pl.num_programs(1) - 1)
    def _():
        r = acc_ref[...] + b_ref[...]          # bias add in f32 (VPU)
        if apply_relu:
            r = jnp.maximum(r, 0.0)            # ReLU in f32 before any downcast
        out_ref[...] = r.astype(out_ref.dtype)


def _gcn_aggregate(a_p, xw_p, b_p, *, apply_relu, out_dtype, tm, tk):
    """out = A_hat @ XW + b on padded inputs.
    a_p: (Np, Np) bf16, xw_p: (Np, Cout) bf16, b_p: (1, Cout) f32."""
    n_p = a_p.shape[0]
    cout = xw_p.shape[1]
    grid = (n_p // tm, n_p // tk)              # (row tiles, reduction tiles)

    xw_resident = (n_p * cout * xw_p.dtype.itemsize) <= _XW_RESIDENT_BYTES
    if xw_resident:
        xw_spec = pl.BlockSpec((n_p, cout), lambda i, k: (0, 0))   # DMA once
    else:
        xw_spec = pl.BlockSpec((tk, cout), lambda i, k: (k, 0))    # stream k tile

    acc_in_out = (out_dtype == jnp.float32)
    scratch = [] if acc_in_out else [pltpu.VMEM((tm, cout), jnp.float32)]

    kernel = functools.partial(_gcn_agg_kernel, apply_relu=apply_relu,
                               xw_resident=xw_resident, tk=tk,
                               acc_in_out=acc_in_out)

    return pl.pallas_call(
        kernel,
        out_shape=jax.ShapeDtypeStruct((n_p, cout), out_dtype),
        grid_spec=pltpu.PrefetchScalarGridSpec(
            num_scalar_prefetch=0,
            grid=grid,
            in_specs=[
                pl.BlockSpec((tm, tk), lambda i, k: (i, k)),       # A_hat tile
                xw_spec,                                           # XW
                pl.BlockSpec((1, cout), lambda i, k: (0, 0)),      # bias (resident)
            ],
            out_specs=pl.BlockSpec((tm, cout), lambda i, k: (i, 0)),
            scratch_shapes=scratch,
        ),
        compiler_params=pltpu.CompilerParams(
            dimension_semantics=("parallel", "arbitrary"),
            vmem_limit_bytes=_VMEM_LIMIT,
        ),
    )(a_p, xw_p, b_p)


# ----------------------------------------------------------------------------
# Wrapper: pad to TPU-friendly shapes, run 3 tiled layers (heads fused), slice.
# ----------------------------------------------------------------------------
def _ceil_to(v, m):
    return ((v + m - 1) // m) * m


def _pad2d(x, rows, cols, dtype):
    buf = jnp.zeros((rows, cols), dtype)
    return buf.at[:x.shape[0], :x.shape[1]].set(x.astype(dtype))


def _pad_nodes(n):
    if n <= _MIN_TILE:
        return _MIN_TILE
    return _ceil_to(n, _TILE)


def _pick_tiles(n_p):
    """Biggest A tile that divides n_p; keep >=2 row tiles when possible so the
    'parallel' axis feeds both TensorCores on v7x."""
    tk = _TILE if n_p % _TILE == 0 else _MIN_TILE
    if n_p % _TILE == 0 and n_p // _TILE >= 2:
        tm = _TILE
    elif n_p // _MIN_TILE >= 2:
        tm = _MIN_TILE
    else:
        tm = n_p
    return tm, tk


def variational_gcn_encoder_pallas(a_hat, x, params):
    """Forward pass. a_hat: (N, N) normalized adjacency, x: (N, Cin)."""
    n, in_c = x.shape
    out_c = params["w_mu"].shape[1]

    n_p = _pad_nodes(n)
    tm, tk = _pick_tiles(n_p)

    c_in_p = _ceil_to(in_c, _LANE)
    c1_p = _ceil_to(params["w1"].shape[1], _LANE)
    c2_p = _ceil_to(params["w2"].shape[1], _LANE)
    ch_p = _ceil_to(2 * out_c, _LANE)

    a_p = _pad2d(a_hat, n_p, n_p, jnp.bfloat16)
    x_p = _pad2d(x, n_p, c_in_p, jnp.bfloat16)

    w1_p = _pad2d(params["w1"], c_in_p, c1_p, jnp.bfloat16)
    b1_p = _pad2d(params["b1"], 1, c1_p, jnp.float32)
    w2_p = _pad2d(params["w2"], c1_p, c2_p, jnp.bfloat16)
    b2_p = _pad2d(params["b2"], 1, c2_p, jnp.float32)

    # Fused mu/logstd head: single (4C, 2*out_c) weight -> one A @ (.) matmul.
    w_head = jnp.concatenate([params["w_mu"], params["w_logstd"]], axis=1)
    b_head = jnp.concatenate([params["b_mu"], params["b_logstd"]], axis=1)
    wh_p = _pad2d(w_head, c2_p, ch_p, jnp.bfloat16)
    bh_p = _pad2d(b_head, 1, ch_p, jnp.float32)

    def xw(h, w):  # X @ W hoisted out of the Pallas grid; f32 acc, one bf16 cast
        return jnp.dot(h, w, preferred_element_type=jnp.float32).astype(jnp.bfloat16)

    h = _gcn_aggregate(a_p, xw(x_p, w1_p), b1_p, apply_relu=True,
                       out_dtype=jnp.bfloat16, tm=tm, tk=tk)
    h = _gcn_aggregate(a_p, xw(h, w2_p), b2_p, apply_relu=True,
                       out_dtype=jnp.bfloat16, tm=tm, tk=tk)
    head = _gcn_aggregate(a_p, xw(h, wh_p), bh_p, apply_relu=False,
                          out_dtype=jnp.float32, tm=tm, tk=tk)

    mu = head[:n, :out_c]
    logstd = head[:n, out_c:2 * out_c]
    return mu, logstd


# ----------------------------------------------------------------------------
# Glue: dense symmetric-normalized adjacency (PyG gcn_norm with self-loops).
# Note: self-loops are added unconditionally (A + I); if edge_index already
# contains self-loops this differs from PyG's add_remaining_self_loops — the
# reference below uses the same a_hat, so the comparison stays consistent.
# ----------------------------------------------------------------------------
def gcn_norm_dense(edge_index, edge_weight, num_nodes):
    src, dst = edge_index[0], edge_index[1]
    A = jnp.zeros((num_nodes, num_nodes), jnp.float32).at[dst, src].add(edge_weight)
    A = A + jnp.eye(num_nodes, dtype=jnp.float32)          # self-loops, weight 1
    deg = A.sum(axis=1)
    d_inv_sqrt = jnp.where(deg > 0, deg ** -0.5, 0.0)
    return d_inv_sqrt[:, None] * A * d_inv_sqrt[None, :]


# ----------------------------------------------------------------------------
# Deterministic parameter init (shapes: in_c -> 2*out_c -> 4*out_c -> out_c)
# ----------------------------------------------------------------------------
def init_params(key, in_channels, out_channels):
    dims = [(in_channels, 2 * out_channels),
            (2 * out_channels, 4 * out_channels),
            (4 * out_channels, out_channels),
            (4 * out_channels, out_channels)]
    names = ["1", "2", "_mu", "_logstd"]
    params = {}
    for name, (cin, cout) in zip(names, dims):
        key, kw, kb = jax.random.split(key, 3)
        scale = (6.0 / (cin + cout)) ** 0.5                 # glorot-uniform-like
        params[f"w{name}"] = jax.random.uniform(
            kw, (cin, cout), jnp.float32, minval=-scale, maxval=scale)
        params[f"b{name}"] = jax.random.uniform(
            kb, (1, cout), jnp.float32, minval=-0.1, maxval=0.1)
    return params


# Plain-JAX f32 reference for correctness (bf16 kernel -> loosened tolerances).
def reference_forward(a_hat, x, p):
    gcn = lambda h, w, b: a_hat @ (h @ w) + b
    h = jax.nn.relu(gcn(x, p["w1"], p["b1"]))
    h = jax.nn.relu(gcn(h, p["w2"], p["b2"]))
    return gcn(h, p["w_mu"], p["b_mu"]), gcn(h, p["w_logstd"], p["b_logstd"])


if __name__ == "__main__":
    key = jax.random.PRNGKey(0)

    N, E = 16, 32                 # nodes, edges
    in_channels, out_channels = 4, 8

    k_x, k_src, k_dst, k_w, k_p = jax.random.split(key, 5)
    x = jax.random.normal(k_x, (N, in_channels), jnp.float32)
    edge_index = jnp.stack([
        jax.random.randint(k_src, (E,), 0, N),
        jax.random.randint(k_dst, (E,), 0, N),
    ], axis=0)
    edge_weight = jax.random.uniform(k_w, (E,), jnp.float32, minval=0.1, maxval=1.0)

    params = init_params(k_p, in_channels, out_channels)
    a_hat = gcn_norm_dense(edge_index, edge_weight, N)

    mu, logstd = variational_gcn_encoder_pallas(a_hat, x, params)
    mu, logstd = jax.block_until_ready((mu, logstd))

    mu_ref, logstd_ref = reference_forward(a_hat, x, params)
    assert mu.shape == (N, out_channels) and logstd.shape == (N, out_channels)
    # bf16 MXU inputs (f32 accumulation) vs f32 reference -> loosened tolerances.
    assert jnp.allclose(mu, mu_ref, atol=5e-2, rtol=5e-2)
    assert jnp.allclose(logstd, logstd_ref, atol=5e-2, rtol=5e-2)

    print("KERNEL_OK")
</pallas_src>

<mosaic_0001>
module attributes {stable_mosaic.version = 11 : i64} {
  func.func @_gcn_agg_kernel(%arg0: i32, %arg1: i32, %arg2: memref<256x256xbf16, #tpu.memory_space<vmem>>, %arg3: memref<256x128xbf16, #tpu.memory_space<vmem>>, %arg4: memref<1x128xf32, #tpu.memory_space<vmem>>, %arg5: memref<256x128xbf16, #tpu.memory_space<vmem>>, %arg6: memref<256x128xf32, #tpu.memory_space<vmem>>) attributes {dimension_semantics = [#tpu.dimension_semantics<parallel>, #tpu.dimension_semantics<arbitrary>], iteration_bounds = array<i64: 1, 1>, scalar_prefetch = 0 : i64, scratch_operands = 1 : i64, tpu.core_type = #tpu.core_type<tc>, window_params = [{transform_indices = @transform_0, window_bounds = array<i64: 256, 256>}, {pipeline_mode = #tpu.pipeline_mode<synchronous>, transform_indices = @transform_1, window_bounds = array<i64: 256, 128>}, {pipeline_mode = #tpu.pipeline_mode<synchronous>, transform_indices = @transform_2, window_bounds = array<i64: 1, 128>}, {transform_indices = @transform_3, window_bounds = array<i64: 256, 128>}]} {
    %c0_i32 = arith.constant 0 : i32
    %0 = arith.cmpi eq, %arg1, %c0_i32 : i32
    %1 = arith.extui %0 : i1 to i32
    %c0_i32_0 = arith.constant 0 : i32
    %2 = arith.cmpi ne, %1, %c0_i32_0 : i32
    scf.if %2 {
      %cst_9 = arith.constant 0.000000e+00 : f32
      %15 = vector.broadcast %cst_9 : f32 to vector<256x128xf32>
      %c0_10 = arith.constant 0 : index
      %c0_11 = arith.constant 0 : index
      %16 = vector.load %arg6[%c0_10, %c0_11] : memref<256x128xf32, #tpu.memory_space<vmem>>, vector<256x128xf32>
      tpu.vector_store %arg6[%c0_10, %c0_11], %15 {strides = array<i32>} : memref<256x128xf32, #tpu.memory_space<vmem>>, vector<256x128xf32>,
    } else {
    }
    %c256_i32 = arith.constant 256 : i32
    %3 = arith.muli %arg1, %c256_i32 : i32
    %4 = tpu.assume_multiple %3, 256 : i32
    %5 = arith.index_cast %4 : i32 to index
    %c0 = arith.constant 0 : index
    %6 = vector.load %arg3[%5, %c0] : memref<256x128xbf16, #tpu.memory_space<vmem>>, vector<256x128xbf16>
    %c0_1 = arith.constant 0 : index
    %c0_2 = arith.constant 0 : index
    %7 = vector.load %arg6[%c0_1, %c0_2] : memref<256x128xf32, #tpu.memory_space<vmem>>, vector<256x128xf32>
    %c0_3 = arith.constant 0 : index
    %c0_4 = arith.constant 0 : index
    %8 = vector.load %arg2[%c0_3, %c0_4] : memref<256x256xbf16, #tpu.memory_space<vmem>>, vector<256x256xbf16>
    %cst = arith.constant dense<0.000000e+00> : vector<256x128xf32>
    %9 = tpu.matmul %8, %6, %cst {dimension_numbers = #tpu.dot_dimension_numbers<[1], [0], [0], [1], [0, 0, 1, 1], [], []>} : vector<256x256xbf16>, vector<256x128xbf16>, vector<256x128xf32> -> vector<256x128xf32>
    %10 = arith.addf %7, %9 : vector<256x128xf32>
    %c0_5 = arith.constant 0 : index
    %c0_6 = arith.constant 0 : index
    %11 = vector.load %arg6[%c0_5, %c0_6] : memref<256x128xf32, #tpu.memory_space<vmem>>, vector<256x128xf32>
    tpu.vector_store %arg6[%c0_5, %c0_6], %10 {strides = array<i32>} : memref<256x128xf32, #tpu.memory_space<vmem>>, vector<256x128xf32>,
    %c0_i32_7 = arith.constant 0 : i32
    %12 = arith.cmpi eq, %arg1, %c0_i32_7 : i32
    %13 = arith.extui %12 : i1 to i32
    %c0_i32_8 = arith.constant 0 : i32
    %14 = arith.cmpi ne, %13, %c0_i32_8 : i32
    scf.if %14 {
      %c0_9 = arith.constant 0 : index
      %c0_10 = arith.constant 0 : index
      %15 = vector.load %arg6[%c0_9, %c0_10] : memref<256x128xf32, #tpu.memory_space<vmem>>, vector<256x128xf32>
      %c0_11 = arith.constant 0 : index
      %c0_12 = arith.constant 0 : index
      %16 = vector.load %arg4[%c0_11, %c0_12] : memref<1x128xf32, #tpu.memory_space<vmem>>, vector<1x128xf32>
      %17 = vector.broadcast %16 : vector<1x128xf32> to vector<256x128xf32>
      %18 = arith.addf %15, %17 : vector<256x128xf32>
      %cst_13 = arith.constant 0.000000e+00 : f32
      %19 = vector.broadcast %cst_13 : f32 to vector<256x128xf32>
      %20 = arith.maximumf %18, %19 : vector<256x128xf32>
      %21 = arith.truncf %20 : vector<256x128xf32> to vector<256x128xbf16>
      %c0_14 = arith.constant 0 : index
      %c0_15 = arith.constant 0 : index
      %22 = vector.load %arg5[%c0_14, %c0_15] : memref<256x128xbf16, #tpu.memory_space<vmem>>, vector<256x128xbf16>
      tpu.vector_store %arg5[%c0_14, %c0_15], %21 {strides = array<i32>} : memref<256x128xbf16, #tpu.memory_space<vmem>>, vector<256x128xbf16>,
    } else {
    }
    return
  }
  func.func @transform_0(%arg0: i32, %arg1: i32) -> (i32, i32) {
    %c0_i32 = arith.constant 0 : i32
    return %arg0, %arg1 : i32, i32
  }
  func.func @transform_1(%arg0: i32, %arg1: i32) -> (i32, i32) {
    %c0_i32 = arith.constant 0 : i32
    %c0_i32_0 = arith.constant 0 : i32
    %c0_i32_1 = arith.constant 0 : i32
    return %c0_i32, %c0_i32_0 : i32, i32
  }
  func.func @transform_2(%arg0: i32, %arg1: i32) -> (i32, i32) {
    %c0_i32 = arith.constant 0 : i32
    %c0_i32_0 = arith.constant 0 : i32
    %c0_i32_1 = arith.constant 0 : i32
    return %c0_i32, %c0_i32_0 : i32, i32
  }
  func.func @transform_3(%arg0: i32, %arg1: i32) -> (i32, i32) {
    %c0_i32 = arith.constant 0 : i32
    %c0_i32_0 = arith.constant 0 : i32
    return %arg0, %c0_i32 : i32, i32
  }
}

</mosaic_0001>

<llo_original>
// kernel: tpu_custom_call.1
$region0: #{tpu_custom_call.1}
  #allocation0 [shape = 'u32[]', space=smem, size = 0x4, offset = 0x4, fixed_abs, tag = 'smem constant byte address 0x4 - core index']
  #allocation1 [shape = 'u32[144,128]{1,0:T(1,128)}', space=vmem, size = 0x12000, scoped, tag = 'internal scratch']
  #allocation2 [shape = 'f32[256,128]{1,0:T(8,128)}', space=vmem, size = 0x20000, scoped, tag = 'scratch operand']
  %s0 = inlined_call_operand.hbm [shape: bf16[256,256], index: 0, kind: input, shape index: {}]
  %s1 = inlined_call_operand.hbm [shape: bf16[256,128], index: 1, kind: input, shape index: {}]
  %s2 = inlined_call_operand.vmem [shape: f32[1,128], index: 2, kind: input, shape index: {}]
  %s3 = inlined_call_operand.hbm [shape: bf16[256,128], index: 3, kind: output, shape index: {}]
  %s4 = sld [smem:[#allocation0]]
  $region38: #{tpu_custom_call.1} parent=0
    _
  %s6 = ssub.s32 1, %s4
  %s7 = scalar_select 0, %s6, %s4
  $region1: #{tpu_custom_call.1} parent=0
    #allocation3 [shape = 'u8[131072]{0}', space=vmem, size = 0x20000, scoped, tag = 'input window, operand 0, single buffered']
    #allocation4 [shape = 's32[1]{0}', space=sflag, size = 0x4, scoped, tag = 'scoped memory for tpu_custom_call.1']
    #allocation5 [shape = 's32[1]{0}', space=sflag, size = 0x4, scoped, tag = 'scoped memory for tpu_custom_call.1']
    #allocation6 [shape = 'u8[65536]{0}', space=vmem, size = 0x10000, scoped, tag = 'input window, operand 1, single buffered']
    #allocation7 [shape = 's32[1]{0}', space=sflag, size = 0x4, scoped, tag = 'scoped memory for tpu_custom_call.1']
    #allocation8 [shape = 'u8[65536]{0}', space=vmem, size = 0x10000, scoped, tag = 'output window, operand 0, single buffered']
    %8 = vsyncpa [#allocation4], 0
    %9 = vsyncpa [#allocation7], 0
    %10 = vsyncpa [#allocation5], 0
    // Predicated region
    $region2: #{tpu_custom_call.1} parent=1 // pred_check
      _
    $region3: #{tpu_custom_call.1} parent=1 // pred_check_branch
      %12 = sbr.rel (0) target = $region5
    $region4: #{tpu_custom_call.1} parent=1 // pred_region
      %s14 = ssub.s32 4096, 4096
      %15 = vsyncadd [#allocation4], %s14
      %s16 = sshll.u32 [#allocation3], 4
      %s17 = int_to_ptr.vmem [resolvable:$true] %s16
      %22 = dma.hbm_to_vmem [thread:$0]  %s0, 4096, %s17, [#allocation4], 128, 128, 8
    $region5: #{tpu_custom_call.1} parent=1 // pred_fallthru
      _
    // Predicated region
    $region6: #{tpu_custom_call.1} parent=1 // pred_check
      _
    $region7: #{tpu_custom_call.1} parent=1 // pred_check_branch
      %24 = sbr.rel (0) target = $region9
    $region8: #{tpu_custom_call.1} parent=1 // pred_region
      %s26 = ssub.s32 2048, 2048
      %27 = vsyncadd [#allocation7], %s26
      %s28 = sshll.u32 [#allocation6], 4
      %s29 = int_to_ptr.vmem [resolvable:$true] %s28
      %34 = dma.hbm_to_vmem [thread:$0]  %s1, 2048, %s29, [#allocation7], 64, 64, 4
    $region9: #{tpu_custom_call.1} parent=1 // pred_fallthru
      _
    // Predicated region
    $region10: #{tpu_custom_call.1} parent=1 // pred_check
      _
    $region11: #{tpu_custom_call.1} parent=1 // pred_check_branch
      %36 = sbr.rel (0) target = $region13
    $region12: #{tpu_custom_call.1} parent=1 // pred_region
      _
    $region13: #{tpu_custom_call.1} parent=1 // pred_fallthru
      _
    // Predicated region
    $region14: #{tpu_custom_call.1} parent=1 // pred_check
      _
    $region15: #{tpu_custom_call.1} parent=1 // pred_check_branch
      %38 = sbr.rel (0) target = $region17
    $region16: #{tpu_custom_call.1} parent=1 // pred_region
      %39 = dma.done [#allocation4], 4096
    $region17: #{tpu_custom_call.1} parent=1 // pred_fallthru
      _
    // Predicated region
    $region18: #{tpu_custom_call.1} parent=1 // pred_check
      _
    $region19: #{tpu_custom_call.1} parent=1 // pred_check_branch
      %41 = sbr.rel (0) target = $region21
    $region20: #{tpu_custom_call.1} parent=1 // pred_region
      %42 = dma.done [#allocation7], 2048
    $region21: #{tpu_custom_call.1} parent=1 // pred_fallthru
      _
    %p44 = scmp.eq.s32.totalorder 0, 0
    // Predicated region
    $region22: #{tpu_custom_call.1} parent=1 // pred_check
      %p45 = pneg %p44
    $region23: #{tpu_custom_call.1} parent=1 // pred_check_branch
      %47 = sbr.rel (%p45) target = $region25
    $region24: #{tpu_custom_call.1} parent=1 // pred_region
      %48 = vst [vmem:[#allocation2] sm:$0xff] 0.0
      %49 = vst [vmem:[#allocation2 + $0x8] sm:$0xff] 0.0
      %50 = vst [vmem:[#allocation2 + $0x10] sm:$0xff] 0.0
      %51 = vst [vmem:[#allocation2 + $0x18] sm:$0xff] 0.0
      %52 = vst [vmem:[#allocation2 + $0x20] sm:$0xff] 0.0
      %53 = vst [vmem:[#allocation2 + $0x28] sm:$0xff] 0.0
      %54 = vst [vmem:[#allocation2 + $0x30] sm:$0xff] 0.0
      %55 = vst [vmem:[#allocation2 + $0x38] sm:$0xff] 0.0
      %56 = vst [vmem:[#allocation2 + $0x40] sm:$0xff] 0.0
      %57 = vst [vmem:[#allocation2 + $0x48] sm:$0xff] 0.0
      %58 = vst [vmem:[#allocation2 + $0x50] sm:$0xff] 0.0
      %59 = vst [vmem:[#allocation2 + $0x58] sm:$0xff] 0.0
      %60 = vst [vmem:[#allocation2 + $0x60] sm:$0xff] 0.0
      %61 = vst [vmem:[#allocation2 + $0x68] sm:$0xff] 0.0
      %62 = vst [vmem:[#allocation2 + $0x70] sm:$0xff] 0.0
      %63 = vst [vmem:[#allocation2 + $0x78] sm:$0xff] 0.0
      %64 = vst [vmem:[#allocation2 + $0x80] sm:$0xff] 0.0
      %65 = vst [vmem:[#allocation2 + $0x88] sm:$0xff] 0.0
      %66 = vst [vmem:[#allocation2 + $0x90] sm:$0xff] 0.0
      %67 = vst [vmem:[#allocation2 + $0x98] sm:$0xff] 0.0
      %68 = vst [vmem:[#allocation2 + $0xa0] sm:$0xff] 0.0
      %69 = vst [vmem:[#allocation2 + $0xa8] sm:$0xff] 0.0
      %70 = vst [vmem:[#allocation2 + $0xb0] sm:$0xff] 0.0
      %71 = vst [vmem:[#allocation2 + $0xb8] sm:$0xff] 0.0
      %72 = vst [vmem:[#allocation2 + $0xc0] sm:$0xff] 0.0
      %73 = vst [vmem:[#allocation2 + $0xc8] sm:$0xff] 0.0
      %74 = vst [vmem:[#allocation2 + $0xd0] sm:$0xff] 0.0
      %75 = vst [vmem:[#allocation2 + $0xd8] sm:$0xff] 0.0
      %76 = vst [vmem:[#allocation2 + $0xe0] sm:$0xff] 0.0
      %77 = vst [vmem:[#allocation2 + $0xe8] sm:$0xff] 0.0
      %78 = vst [vmem:[#allocation2 + $0xf0] sm:$0xff] 0.0
      %79 = vst [vmem:[#allocation2 + $0xf8] sm:$0xff] 0.0
    $region25: #{tpu_custom_call.1} parent=1 // pred_fallthru
      _
    %s80 = smul.u32 0, 256
    %s81 = sshra.s32 %s80, 3
    %s82 = sand.u32 %s80, 7
    %s83 = smul.addr %s81, 4
    %s84 = scalar_lea.vmem [#allocation6], %s83
    %v85 = vld [vmem:[%s84] sm:$0xf]
    %v86 = vld [vmem:[%s84 + $0x4] sm:$0xf]
    %v87 = vld [vmem:[%s84 + $0x8] sm:$0xf]
    %v88 = vld [vmem:[%s84 + $0xc] sm:$0xf]
    %v89 = vld [vmem:[%s84 + $0x10] sm:$0xf]
    %v90 = vld [vmem:[%s84 + $0x14] sm:$0xf]
    %v91 = vld [vmem:[%s84 + $0x18] sm:$0xf]
    %v92 = vld [vmem:[%s84 + $0x1c] sm:$0xf]
    %v93 = vld [vmem:[%s84 + $0x20] sm:$0xf]
    %v94 = vld [vmem:[%s84 + $0x24] sm:$0xf]
    %v95 = vld [vmem:[%s84 + $0x28] sm:$0xf]
    %v96 = vld [vmem:[%s84 + $0x2c] sm:$0xf]
    %v97 = vld [vmem:[%s84 + $0x30] sm:$0xf]
    %v98 = vld [vmem:[%s84 + $0x34] sm:$0xf]
    %v99 = vld [vmem:[%s84 + $0x38] sm:$0xf]
    %v100 = vld [vmem:[%s84 + $0x3c] sm:$0xf]
    %v101 = vld [vmem:[%s84 + $0x40] sm:$0xf]
    %v102 = vld [vmem:[%s84 + $0x44] sm:$0xf]
    %v103 = vld [vmem:[%s84 + $0x48] sm:$0xf]
    %v104 = vld [vmem:[%s84 + $0x4c] sm:$0xf]
    %v105 = vld [vmem:[%s84 + $0x50] sm:$0xf]
    %v106 = vld [vmem:[%s84 + $0x54] sm:$0xf]
    %v107 = vld [vmem:[%s84 + $0x58] sm:$0xf]
    %v108 = vld [vmem:[%s84 + $0x5c] sm:$0xf]
    %v109 = vld [vmem:[%s84 + $0x60] sm:$0xf]
    %v110 = vld [vmem:[%s84 + $0x64] sm:$0xf]
    %v111 = vld [vmem:[%s84 + $0x68] sm:$0xf]
    %v112 = vld [vmem:[%s84 + $0x6c] sm:$0xf]
    %v113 = vld [vmem:[%s84 + $0x70] sm:$0xf]
    %v114 = vld [vmem:[%s84 + $0x74] sm:$0xf]
    %v115 = vld [vmem:[%s84 + $0x78] sm:$0xf]
    %v116 = vld [vmem:[%s84 + $0x7c] sm:$0xf]
    %v117 = vld [vmem:[#allocation2] sm:$0xff]
    %v118 = vld [vmem:[#allocation2 + $0x8] sm:$0xff]
    %v119 = vld [vmem:[#allocation2 + $0x10] sm:$0xff]
    %v120 = vld [vmem:[#allocation2 + $0x18] sm:$0xff]
    %v121 = vld [vmem:[#allocation2 + $0x20] sm:$0xff]
    %v122 = vld [vmem:[#allocation2 + $0x28] sm:$0xff]
    %v123 = vld [vmem:[#allocation2 + $0x30] sm:$0xff]
    %v124 = vld [vmem:[#allocation2 + $0x38] sm:$0xff]
    %v125 = vld [vmem:[#allocation2 + $0x40] sm:$0xff]
    %v126 = vld [vmem:[#allocation2 + $0x48] sm:$0xff]
    %v127 = vld [vmem:[#allocation2 + $0x50] sm:$0xff]
    %v128 = vld [vmem:[#allocation2 + $0x58] sm:$0xff]
    %v129 = vld [vmem:[#allocation2 + $0x60] sm:$0xff]
    %v130 = vld [vmem:[#allocation2 + $0x68] sm:$0xff]
    %v131 = vld [vmem:[#allocation2 + $0x70] sm:$0xff]
    %v132 = vld [vmem:[#allocation2 + $0x78] sm:$0xff]
    %v133 = vld [vmem:[#allocation2 + $0x80] sm:$0xff]
    %v134 = vld [vmem:[#allocation2 + $0x88] sm:$0xff]
    %v135 = vld [vmem:[#allocation2 + $0x90] sm:$0xff]
    %v136 = vld [vmem:[#allocation2 + $0x98] sm:$0xff]
    %v137 = vld [vmem:[#allocation2 + $0xa0] sm:$0xff]
    %v138 = vld [vmem:[#allocation2 + $0xa8] sm:$0xff]
    %v139 = vld [vmem:[#allocation2 + $0xb0] sm:$0xff]
    %v140 = vld [vmem:[#allocation2 + $0xb8] sm:$0xff]
    %v141 = vld [vmem:[#allocation2 + $0xc0] sm:$0xff]
    %v142 = vld [vmem:[#allocation2 + $0xc8] sm:$0xff]
    %v143 = vld [vmem:[#allocation2 + $0xd0] sm:$0xff]
    %v144 = vld [vmem:[#allocation2 + $0xd8] sm:$0xff]
    %v145 = vld [vmem:[#allocation2 + $0xe0] sm:$0xff]
    %v146 = vld [vmem:[#allocation2 + $0xe8] sm:$0xff]
    %v147 = vld [vmem:[#allocation2 + $0xf0] sm:$0xff]
    %v148 = vld [vmem:[#allocation2 + $0xf8] sm:$0xff]
    %v149 = vld [vmem:[#allocation3] sm:$0xff]
    %v150 = vld [vmem:[#allocation3 + $0x8] sm:$0xff]
    %v151 = vld [vmem:[#allocation3 + $0x10] sm:$0xff]
    %v152 = vld [vmem:[#allocation3 + $0x18] sm:$0xff]
    %v153 = vld [vmem:[#allocation3 + $0x20] sm:$0xff]
    %v154 = vld [vmem:[#allocation3 + $0x28] sm:$0xff]
    %v155 = vld [vmem:[#allocation3 + $0x30] sm:$0xff]
    %v156 = vld [vmem:[#allocation3 + $0x38] sm:$0xff]
    %v157 = vld [vmem:[#allocation3 + $0x40] sm:$0xff]
    %v158 = vld [vmem:[#allocation3 + $0x48] sm:$0xff]
    %v159 = vld [vmem:[#allocation3 + $0x50] sm:$0xff]
    %v160 = vld [vmem:[#allocation3 + $0x58] sm:$0xff]
    %v161 = vld [vmem:[#allocation3 + $0x60] sm:$0xff]
    %v162 = vld [vmem:[#allocation3 + $0x68] sm:$0xff]
    %v163 = vld [vmem:[#allocation3 + $0x70] sm:$0xff]
    %v164 = vld [vmem:[#allocation3 + $0x78] sm:$0xff]
    %v165 = vld [vmem:[#allocation3 + $0x80] sm:$0xff]
    %v166 = vld [vmem:[#allocation3 + $0x88] sm:$0xff]
    %v167 = vld [vmem:[#allocation3 + $0x90] sm:$0xff]
    %v168 = vld [vmem:[#allocation3 + $0x98] sm:$0xff]
    %v169 = vld [vmem:[#allocation3 + $0xa0] sm:$0xff]
    %v170 = vld [vmem:[#allocation3 + $0xa8] sm:$0xff]
    %v171 = vld [vmem:[#allocation3 + $0xb0] sm:$0xff]
    %v172 = vld [vmem:[#allocation3 + $0xb8] sm:$0xff]
    %v173 = vld [vmem:[#allocation3 + $0xc0] sm:$0xff]
    %v174 = vld [vmem:[#allocation3 + $0xc8] sm:$0xff]
    %v175 = vld [vmem:[#allocation3 + $0xd0] sm:$0xff]
    %v176 = vld [vmem:[#allocation3 + $0xd8] sm:$0xff]
    %v177 = vld [vmem:[#allocation3 + $0xe0] sm:$0xff]
    %v178 = vld [vmem:[#allocation3 + $0xe8] sm:$0xff]
    %v179 = vld [vmem:[#allocation3 + $0xf0] sm:$0xff]
    %v180 = vld [vmem:[#allocation3 + $0xf8] sm:$0xff]
    %v213 = vunpack.c.l.b16 %v149
    %v214 = vunpack.c.h.b16 %v149
    %v215 = vunpack.c.l.b16 %v150
    %v216 = vunpack.c.h.b16 %v150
    %v217 = vunpack.c.l.b16 %v151
    %v218 = vunpack.c.h.b16 %v151
    %v219 = vunpack.c.l.b16 %v152
    %v220 = vunpack.c.h.b16 %v152
    %v221 = vunpack.c.l.b16 %v153
    %v222 = vunpack.c.h.b16 %v153
    %v223 = vunpack.c.l.b16 %v154
    %v224 = vunpack.c.h.b16 %v154
    %v225 = vunpack.c.l.b16 %v155
    %v226 = vunpack.c.h.b16 %v155
    %v227 = vunpack.c.l.b16 %v156
    %v228 = vunpack.c.h.b16 %v156
    %v229 = vunpack.c.l.b16 %v157
    %v230 = vunpack.c.h.b16 %v157
    %v231 = vunpack.c.l.b16 %v158
    %v232 = vunpack.c.h.b16 %v158
    %v233 = vunpack.c.l.b16 %v159
    %v234 = vunpack.c.h.b16 %v159
    %v235 = vunpack.c.l.b16 %v160
    %v236 = vunpack.c.h.b16 %v160
    %v237 = vunpack.c.l.b16 %v161
    %v238 = vunpack.c.h.b16 %v161
    %v239 = vunpack.c.l.b16 %v162
    %v240 = vunpack.c.h.b16 %v162
    %v241 = vunpack.c.l.b16 %v163
    %v242 = vunpack.c.h.b16 %v163
    %v243 = vunpack.c.l.b16 %v164
    %v244 = vunpack.c.h.b16 %v164
    %v245 = vunpack.c.l.b16 %v165
    %v246 = vunpack.c.h.b16 %v165
    %v247 = vunpack.c.l.b16 %v166
    %v248 = vunpack.c.h.b16 %v166
    %v249 = vunpack.c.l.b16 %v167
    %v250 = vunpack.c.h.b16 %v167
    %v251 = vunpack.c.l.b16 %v168
    %v252 = vunpack.c.h.b16 %v168
    %v253 = vunpack.c.l.b16 %v169
    %v254 = vunpack.c.h.b16 %v169
    %v255 = vunpack.c.l.b16 %v170
    %v256 = vunpack.c.h.b16 %v170
    %v257 = vunpack.c.l.b16 %v171
    %v258 = vunpack.c.h.b16 %v171
    %v259 = vunpack.c.l.b16 %v172
    %v260 = vunpack.c.h.b16 %v172
    %v261 = vunpack.c.l.b16 %v173
    %v262 = vunpack.c.h.b16 %v173
    %v263 = vunpack.c.l.b16 %v174
    %v264 = vunpack.c.h.b16 %v174
    %v265 = vunpack.c.l.b16 %v175
    %v266 = vunpack.c.h.b16 %v175
    %v267 = vunpack.c.l.b16 %v176
    %v268 = vunpack.c.h.b16 %v176
    %v269 = vunpack.c.l.b16 %v177
    %v270 = vunpack.c.h.b16 %v177
    %v271 = vunpack.c.l.b16 %v178
    %v272 = vunpack.c.h.b16 %v178
    %v273 = vunpack.c.l.b16 %v179
    %v274 = vunpack.c.h.b16 %v179
    %v275 = vunpack.c.l.b16 %v180
    %v276 = vunpack.c.h.b16 %v180
    %v277 = vpack.c.b16 %v215, %v213
    %v278 = vpack.c.b16 %v216, %v214
    %v279 = vpack.c.b16 %v219, %v217
    %v280 = vpack.c.b16 %v220, %v218
    %v281 = vpack.c.b16 %v223, %v221
    %v282 = vpack.c.b16 %v224, %v222
    %v283 = vpack.c.b16 %v227, %v225
    %v284 = vpack.c.b16 %v228, %v226
    %v285 = vpack.c.b16 %v231, %v229
    %v286 = vpack.c.b16 %v232, %v230
    %v287 = vpack.c.b16 %v235, %v233
    %v288 = vpack.c.b16 %v236, %v234
    %v289 = vpack.c.b16 %v239, %v237
    %v290 = vpack.c.b16 %v240, %v238
    %v291 = vpack.c.b16 %v243, %v241
    %v292 = vpack.c.b16 %v244, %v242
    %v293 = vpack.c.b16 %v247, %v245
    %v294 = vpack.c.b16 %v248, %v246
    %v295 = vpack.c.b16 %v251, %v249
    %v296 = vpack.c.b16 %v252, %v250
    %v297 = vpack.c.b16 %v255, %v253
    %v298 = vpack.c.b16 %v256, %v254
    %v299 = vpack.c.b16 %v259, %v257
    %v300 = vpack.c.b16 %v260, %v258
    %v301 = vpack.c.b16 %v263, %v261
    %v302 = vpack.c.b16 %v264, %v262
    %v303 = vpack.c.b16 %v267, %v265
    %v304 = vpack.c.b16 %v268, %v266
    %v305 = vpack.c.b16 %v271, %v269
    %v306 = vpack.c.b16 %v272, %v270
    %v307 = vpack.c.b16 %v275, %v273
    %v308 = vpack.c.b16 %v276, %v274
    %v373 = vunpack.c.l.b16 %v85
    %v374 = vunpack.c.l.b16 %v86
    %v375 = vunpack.c.l.b16 %v87
    %v376 = vunpack.c.l.b16 %v88
    %v377 = vunpack.c.l.b16 %v89
    %v378 = vunpack.c.l.b16 %v90
    %v379 = vunpack.c.l.b16 %v91
    %v380 = vunpack.c.l.b16 %v92
    %v381 = vunpack.c.l.b16 %v93
    %v382 = vunpack.c.l.b16 %v94
    %v383 = vunpack.c.l.b16 %v95
    %v384 = vunpack.c.l.b16 %v96
    %v385 = vunpack.c.l.b16 %v97
    %v386 = vunpack.c.l.b16 %v98
    %v387 = vunpack.c.l.b16 %v99
    %v388 = vunpack.c.l.b16 %v100
    %v389 = vunpack.c.l.b16 %v101
    %v390 = vunpack.c.l.b16 %v102
    %v391 = vunpack.c.l.b16 %v103
    %v392 = vunpack.c.l.b16 %v104
    %v393 = vunpack.c.l.b16 %v105
    %v394 = vunpack.c.l.b16 %v106
    %v395 = vunpack.c.l.b16 %v107
    %v396 = vunpack.c.l.b16 %v108
    %v397 = vunpack.c.l.b16 %v109
    %v398 = vunpack.c.l.b16 %v110
    %v399 = vunpack.c.l.b16 %v111
    %v400 = vunpack.c.l.b16 %v112
    %v401 = vunpack.c.l.b16 %v113
    %v402 = vunpack.c.l.b16 %v114
    %v403 = vunpack.c.l.b16 %v115
    %v404 = vunpack.c.l.b16 %v116
    %v405 = vpack.c.b16 %v374, %v373
    %v406 = vpack.c.b16 %v376, %v375
    %v407 = vpack.c.b16 %v378, %v377
    %v408 = vpack.c.b16 %v380, %v379
    %v409 = vpack.c.b16 %v382, %v381
    %v410 = vpack.c.b16 %v384, %v383
    %v411 = vpack.c.b16 %v386, %v385
    %v412 = vpack.c.b16 %v388, %v387
    %v413 = vpack.c.b16 %v390, %v389
    %v414 = vpack.c.b16 %v392, %v391
    %v415 = vpack.c.b16 %v394, %v393
    %v416 = vpack.c.b16 %v396, %v395
    %v417 = vpack.c.b16 %v398, %v397
    %v418 = vpack.c.b16 %v400, %v399
    %v419 = vpack.c.b16 %v402, %v401
    %v420 = vpack.c.b16 %v404, %v403
    %437 = vmatprep.subr.bf16.mxu0 0
    %438 = vmatpush1.bf16.msra.mxu0 %v405
    %439 = vmatprep.subr.bf16.mxu0 0
    %440 = vmatpush1.bf16.msra.mxu0 %v406
    %441 = vmatprep.subr.bf16.mxu0 0
    %442 = vmatpush1.bf16.msra.mxu0 %v407
    %443 = vmatprep.subr.bf16.mxu0 0
    %444 = vmatpush1.bf16.msra.mxu0 %v408
    %445 = vmatprep.subr.bf16.mxu0 0
    %446 = vmatpush1.bf16.msra.mxu0 %v409
    %447 = vmatprep.subr.bf16.mxu0 0
    %448 = vmatpush1.bf16.msra.mxu0 %v410
    %449 = vmatprep.subr.bf16.mxu0 0
    %450 = vmatpush1.bf16.msra.mxu0 %v411
    %451 = vmatprep.subr.bf16.mxu0 0
    %452 = vmatpush1.bf16.msra.mxu0 %v412
    %453 = vmatprep.subr.bf16.mxu0 0
    %454 = vmatpush1.bf16.msra.mxu0 %v413
    %455 = vmatprep.subr.bf16.mxu0 0
    %456 = vmatpush1.bf16.msra.mxu0 %v414
    %457 = vmatprep.subr.bf16.mxu0 0
    %458 = vmatpush1.bf16.msra.mxu0 %v415
    %459 = vmatprep.subr.bf16.mxu0 0
    %460 = vmatpush1.bf16.msra.mxu0 %v416
    %461 = vmatprep.subr.bf16.mxu0 0
    %462 = vmatpush1.bf16.msra.mxu0 %v417
    %463 = vmatprep.subr.bf16.mxu0 0
    %464 = vmatpush1.bf16.msra.mxu0 %v418
    %465 = vmatprep.subr.bf16.mxu0 0
    %466 = vmatpush1.bf16.msra.mxu0 %v419
    %467 = vmatprep.subr.bf16.mxu0 0
    %468 = vmatpush1.bf16.msra.mxu0 %v420
    %469 = vmatprep.mubr.bf16.mxu0 %v278
    %470 = vmatmul.mubr.bf16.gmra.mrb[0].mxu0 %v277
    %v471 = vpop.f32.mrb[0].mxu0
    %v472 = vadd.f32 0.0, %v471
    %v473 = vpop.f32.mrb[0].mxu0
    %v474 = vpop.f32.mrb[0].mxu0
    %v475 = vadd.f32 0.0, %v474
    %v476 = vpop.f32.mrb[0].mxu0
    %477 = vmatprep.mubr.bf16.mxu0 %v280
    %478 = vmatmul.mubr.bf16.gmra.mrb[0].mxu0 %v279
    %v479 = vpop.f32.mrb[0].mxu0
    %v480 = vadd.f32 0.0, %v479
    %v481 = vpop.f32.mrb[0].mxu0
    %v482 = vpop.f32.mrb[0].mxu0
    %v483 = vadd.f32 0.0, %v482
    %v484 = vpop.f32.mrb[0].mxu0
    %485 = vmatprep.mubr.bf16.mxu0 %v282
    %486 = vmatmul.mubr.bf16.gmra.mrb[0].mxu0 %v281
    %v487 = vpop.f32.mrb[0].mxu0
    %v488 = vadd.f32 0.0, %v487
    %v489 = vpop.f32.mrb[0].mxu0
    %v490 = vpop.f32.mrb[0].mxu0
    %v491 = vadd.f32 0.0, %v490
    %v492 = vpop.f32.mrb[0].mxu0
    %493 = vmatprep.mubr.bf16.mxu0 %v284
    %494 = vmatmul.mubr.bf16.gmra.mrb[0].mxu0 %v283
    %v495 = vpop.f32.mrb[0].mxu0
    %v496 = vadd.f32 0.0, %v495
    %v497 = vpop.f32.mrb[0].mxu0
    %v498 = vpop.f32.mrb[0].mxu0
    %v499 = vadd.f32 0.0, %v498
    %v500 = vpop.f32.mrb[0].mxu0
    %501 = vmatprep.mubr.bf16.mxu0 %v286
    %502 = vmatmul.mubr.bf16.gmra.mrb[0].mxu0 %v285
    %v503 = vpop.f32.mrb[0].mxu0
    %v504 = vadd.f32 0.0, %v503
    %v505 = vpop.f32.mrb[0].mxu0
    %v506 = vpop.f32.mrb[0].mxu0
    %v507 = vadd.f32 0.0, %v506
    %v508 = vpop.f32.mrb[0].mxu0
    %509 = vmatprep.mubr.bf16.mxu0 %v288
    %510 = vmatmul.mubr.bf16.gmra.mrb[0].mxu0 %v287
    %v511 = vpop.f32.mrb[0].mxu0
    %v512 = vadd.f32 0.0, %v511
    %v513 = vpop.f32.mrb[0].mxu0
    %v514 = vpop.f32.mrb[0].mxu0
    %v515 = vadd.f32 0.0, %v514
    %v516 = vpop.f32.mrb[0].mxu0
    %517 = vmatprep.mubr.bf16.mxu0 %v290
    %518 = vmatmul.mubr.bf16.gmra.mrb[0].mxu0 %v289
    %v519 = vpop.f32.mrb[0].mxu0
    %v520 = vadd.f32 0.0, %v519
    %v521 = vpop.f32.mrb[0].mxu0
    %v522 = vpop.f32.mrb[0].mxu0
    %v523 = vadd.f32 0.0, %v522
    %v524 = vpop.f32.mrb[0].mxu0
    %525 = vmatprep.mubr.bf16.mxu0 %v292
    %526 = vmatmul.mubr.bf16.gmra.mrb[0].mxu0 %v291
    %v527 = vpop.f32.mrb[0].mxu0
    %v528 = vadd.f32 0.0, %v527
    %v529 = vpop.f32.mrb[0].mxu0
    %v530 = vpop.f32.mrb[0].mxu0
    %v531 = vadd.f32 0.0, %v530
    %v532 = vpop.f32.mrb[0].mxu0
    %533 = vmatprep.mubr.bf16.mxu0 %v294
    %534 = vmatmul.mubr.bf16.gmra.mrb[0].mxu0 %v293
    %v535 = vpop.f32.mrb[0].mxu0
    %v536 = vadd.f32 0.0, %v535
    %v537 = vpop.f32.mrb[0].mxu0
    %v538 = vpop.f32.mrb[0].mxu0
    %v539 = vadd.f32 0.0, %v538
    %v540 = vpop.f32.mrb[0].mxu0
    %541 = vmatprep.mubr.bf16.mxu0 %v296
    %542 = vmatmul.mubr.bf16.gmra.mrb[0].mxu0 %v295
    %v543 = vpop.f32.mrb[0].mxu0
    %v544 = vadd.f32 0.0, %v543
    %v545 = vpop.f32.mrb[0].mxu0
    %v546 = vpop.f32.mrb[0].mxu0
    %v547 = vadd.f32 0.0, %v546
    %v548 = vpop.f32.mrb[0].mxu0
    %549 = vmatprep.mubr.bf16.mxu0 %v298
    %550 = vmatmul.mubr.bf16.gmra.mrb[0].mxu0 %v297
    %v551 = vpop.f32.mrb[0].mxu0
    %v552 = vadd.f32 0.0, %v551
    %v553 = vpop.f32.mrb[0].mxu0
    %v554 = vpop.f32.mrb[0].mxu0
    %v555 = vadd.f32 0.0, %v554
    %v556 = vpop.f32.mrb[0].mxu0
    %557 = vmatprep.mubr.bf16.mxu0 %v300
    %558 = vmatmul.mubr.bf16.gmra.mrb[0].mxu0 %v299
    %v559 = vpop.f32.mrb[0].mxu0
    %v560 = vadd.f32 0.0, %v559
    %v561 = vpop.f32.mrb[0].mxu0
    %v562 = vpop.f32.mrb[0].mxu0
    %v563 = vadd.f32 0.0, %v562
    %v564 = vpop.f32.mrb[0].mxu0
    %565 = vmatprep.mubr.bf16.mxu0 %v302
    %566 = vmatmul.mubr.bf16.gmra.mrb[0].mxu0 %v301
    %v567 = vpop.f32.mrb[0].mxu0
    %v568 = vadd.f32 0.0, %v567
    %v569 = vpop.f32.mrb[0].mxu0
    %v570 = vpop.f32.mrb[0].mxu0
    %v571 = vadd.f32 0.0, %v570
    %v572 = vpop.f32.mrb[0].mxu0
    %573 = vmatprep.mubr.bf16.mxu0 %v304
    %574 = vmatmul.mubr.bf16.gmra.mrb[0].mxu0 %v303
    %v575 = vpop.f32.mrb[0].mxu0
    %v576 = vadd.f32 0.0, %v575
    %v577 = vpop.f32.mrb[0].mxu0
    %v578 = vpop.f32.mrb[0].mxu0
    %v579 = vadd.f32 0.0, %v578
    %v580 = vpop.f32.mrb[0].mxu0
    %581 = vmatprep.mubr.bf16.mxu0 %v306
    %582 = vmatmul.mubr.bf16.gmra.mrb[0].mxu0 %v305
    %v583 = vpop.f32.mrb[0].mxu0
    %v584 = vadd.f32 0.0, %v583
    %v585 = vpop.f32.mrb[0].mxu0
    %v586 = vpop.f32.mrb[0].mxu0
    %v587 = vadd.f32 0.0, %v586
    %v588 = vpop.f32.mrb[0].mxu0
    %589 = vmatprep.mubr.bf16.mxu0 %v308
    %590 = vmatmul.mubr.bf16.gmra.mrb[0].mxu0 %v307
    %v591 = vpop.f32.mrb[0].mxu0
    %v592 = vadd.f32 0.0, %v591
    %v593 = vpop.f32.mrb[0].mxu0
    %v594 = vpop.f32.mrb[0].mxu0
    %v595 = vadd.f32 0.0, %v594
    %v596 = vpop.f32.mrb[0].mxu0
    %597 = vdwg.mxu0
    %v598 = vadd.f32 %v117, %v472
    %v599 = vadd.f32 %v118, %v475
    %v600 = vadd.f32 %v119, %v480
    %v601 = vadd.f32 %v120, %v483
    %v602 = vadd.f32 %v121, %v488
    %v603 = vadd.f32 %v122, %v491
    %v604 = vadd.f32 %v123, %v496
    %v605 = vadd.f32 %v124, %v499
    %v606 = vadd.f32 %v125, %v504
    %v607 = vadd.f32 %v126, %v507
    %v608 = vadd.f32 %v127, %v512
    %v609 = vadd.f32 %v128, %v515
    %v610 = vadd.f32 %v129, %v520
    %v611 = vadd.f32 %v130, %v523
    %v612 = vadd.f32 %v131, %v528
    %v613 = vadd.f32 %v132, %v531
    %v614 = vadd.f32 %v133, %v536
    %v615 = vadd.f32 %v134, %v539
    %v616 = vadd.f32 %v135, %v544
    %v617 = vadd.f32 %v136, %v547
    %v618 = vadd.f32 %v137, %v552
    %v619 = vadd.f32 %v138, %v555
    %v620 = vadd.f32 %v139, %v560
    %v621 = vadd.f32 %v140, %v563
    %v622 = vadd.f32 %v141, %v568
    %v623 = vadd.f32 %v142, %v571
    %v624 = vadd.f32 %v143, %v576
    %v625 = vadd.f32 %v144, %v579
    %v626 = vadd.f32 %v145, %v584
    %v627 = vadd.f32 %v146, %v587
    %v628 = vadd.f32 %v147, %v592
    %v629 = vadd.f32 %v148, %v595
    %630 = vst [vmem:[#allocation2] sm:$0xff] %v598
    %631 = vst [vmem:[#allocation2 + $0x8] sm:$0xff] %v599
    %632 = vst [vmem:[#allocation2 + $0x10] sm:$0xff] %v600
    %633 = vst [vmem:[#allocation2 + $0x18] sm:$0xff] %v601
    %634 = vst [vmem:[#allocation2 + $0x20] sm:$0xff] %v602
    %635 = vst [vmem:[#allocation2 + $0x28] sm:$0xff] %v603
    %636 = vst [vmem:[#allocation2 + $0x30] sm:$0xff] %v604
    %637 = vst [vmem:[#allocation2 + $0x38] sm:$0xff] %v605
    %638 = vst [vmem:[#allocation2 + $0x40] sm:$0xff] %v606
    %639 = vst [vmem:[#allocation2 + $0x48] sm:$0xff] %v607
    %640 = vst [vmem:[#allocation2 + $0x50] sm:$0xff] %v608
    %641 = vst [vmem:[#allocation2 + $0x58] sm:$0xff] %v609
    %642 = vst [vmem:[#allocation2 + $0x60] sm:$0xff] %v610
    %643 = vst [vmem:[#allocation2 + $0x68] sm:$0xff] %v611
    %644 = vst [vmem:[#allocation2 + $0x70] sm:$0xff] %v612
    %645 = vst [vmem:[#allocation2 + $0x78] sm:$0xff] %v613
    %646 = vst [vmem:[#allocation2 + $0x80] sm:$0xff] %v614
    %647 = vst [vmem:[#allocation2 + $0x88] sm:$0xff] %v615
    %648 = vst [vmem:[#allocation2 + $0x90] sm:$0xff] %v616
    %649 = vst [vmem:[#allocation2 + $0x98] sm:$0xff] %v617
    %650 = vst [vmem:[#allocation2 + $0xa0] sm:$0xff] %v618
    %651 = vst [vmem:[#allocation2 + $0xa8] sm:$0xff] %v619
    %652 = vst [vmem:[#allocation2 + $0xb0] sm:$0xff] %v620
    %653 = vst [vmem:[#allocation2 + $0xb8] sm:$0xff] %v621
    %654 = vst [vmem:[#allocation2 + $0xc0] sm:$0xff] %v622
    %655 = vst [vmem:[#allocation2 + $0xc8] sm:$0xff] %v623
    %656 = vst [vmem:[#allocation2 + $0xd0] sm:$0xff] %v624
    %657 = vst [vmem:[#allocation2 + $0xd8] sm:$0xff] %v625
    %658 = vst [vmem:[#allocation2 + $0xe0] sm:$0xff] %v626
    %659 = vst [vmem:[#allocation2 + $0xe8] sm:$0xff] %v627
    %660 = vst [vmem:[#allocation2 + $0xf0] sm:$0xff] %v628
    %661 = vst [vmem:[#allocation2 + $0xf8] sm:$0xff] %v629
    // Predicated region
    $region26: #{tpu_custom_call.1} parent=1 // pred_check
      %p662 = pneg %p44
    $region27: #{tpu_custom_call.1} parent=1 // pred_check_branch
      %664 = sbr.rel (%p662) target = $region29
    $region28: #{tpu_custom_call.1} parent=1 // pred_region
      %v665 = vld [vmem:[#allocation2] sm:$0xff]
      %v666 = vld [vmem:[#allocation2 + $0x8] sm:$0xff]
      %v667 = vld [vmem:[#allocation2 + $0x10] sm:$0xff]
      %v668 = vld [vmem:[#allocation2 + $0x18] sm:$0xff]
      %v669 = vld [vmem:[#allocation2 + $0x20] sm:$0xff]
      %v670 = vld [vmem:[#allocation2 + $0x28] sm:$0xff]
      %v671 = vld [vmem:[#allocation2 + $0x30] sm:$0xff]
      %v672 = vld [vmem:[#allocation2 + $0x38] sm:$0xff]
      %v673 = vld [vmem:[#allocation2 + $0x40] sm:$0xff]
      %v674 = vld [vmem:[#allocation2 + $0x48] sm:$0xff]
      %v675 = vld [vmem:[#allocation2 + $0x50] sm:$0xff]
      %v676 = vld [vmem:[#allocation2 + $0x58] sm:$0xff]
      %v677 = vld [vmem:[#allocation2 + $0x60] sm:$0xff]
      %v678 = vld [vmem:[#allocation2 + $0x68] sm:$0xff]
      %v679 = vld [vmem:[#allocation2 + $0x70] sm:$0xff]
      %v680 = vld [vmem:[#allocation2 + $0x78] sm:$0xff]
      %v681 = vld [vmem:[#allocation2 + $0x80] sm:$0xff]
      %v682 = vld [vmem:[#allocation2 + $0x88] sm:$0xff]
      %v683 = vld [vmem:[#allocation2 + $0x90] sm:$0xff]
      %v684 = vld [vmem:[#allocation2 + $0x98] sm:$0xff]
      %v685 = vld [vmem:[#allocation2 + $0xa0] sm:$0xff]
      %v686 = vld [vmem:[#allocation2 + $0xa8] sm:$0xff]
      %v687 = vld [vmem:[#allocation2 + $0xb0] sm:$0xff]
      %v688 = vld [vmem:[#allocation2 + $0xb8] sm:$0xff]
      %v689 = vld [vmem:[#allocation2 + $0xc0] sm:$0xff]
      %v690 = vld [vmem:[#allocation2 + $0xc8] sm:$0xff]
      %v691 = vld [vmem:[#allocation2 + $0xd0] sm:$0xff]
      %v692 = vld [vmem:[#allocation2 + $0xd8] sm:$0xff]
      %v693 = vld [vmem:[#allocation2 + $0xe0] sm:$0xff]
      %v694 = vld [vmem:[#allocation2 + $0xe8] sm:$0xff]
      %v695 = vld [vmem:[#allocation2 + $0xf0] sm:$0xff]
      %v696 = vld [vmem:[#allocation2 + $0xf8] sm:$0xff]
      %v697 = vld [vmem:[%s2] sm:$0x1]
      %v699 = vlaneseq
      %v700 = vshrl.u32 %v699, 7
      %v701 = vsub.s32 0, %v700
      %v702 = vrot.slane %v697, %v701
      %v704 = vadd.f32 %v665, %v702
      %v705 = vadd.f32 %v666, %v702
      %v706 = vadd.f32 %v667, %v702
      %v707 = vadd.f32 %v668, %v702
      %v708 = vadd.f32 %v669, %v702
      %v709 = vadd.f32 %v670, %v702
      %v710 = vadd.f32 %v671, %v702
      %v711 = vadd.f32 %v672, %v702
      %v712 = vadd.f32 %v673, %v702
      %v713 = vadd.f32 %v674, %v702
      %v714 = vadd.f32 %v675, %v702
      %v715 = vadd.f32 %v676, %v702
      %v716 = vadd.f32 %v677, %v702
      %v717 = vadd.f32 %v678, %v702
      %v718 = vadd.f32 %v679, %v702
      %v719 = vadd.f32 %v680, %v702
      %v720 = vadd.f32 %v681, %v702
      %v721 = vadd.f32 %v682, %v702
      %v722 = vadd.f32 %v683, %v702
      %v723 = vadd.f32 %v684, %v702
      %v724 = vadd.f32 %v685, %v702
      %v725 = vadd.f32 %v686, %v702
      %v726 = vadd.f32 %v687, %v702
      %v727 = vadd.f32 %v688, %v702
      %v728 = vadd.f32 %v689, %v702
      %v729 = vadd.f32 %v690, %v702
      %v730 = vadd.f32 %v691, %v702
      %v731 = vadd.f32 %v692, %v702
      %v732 = vadd.f32 %v693, %v702
      %v733 = vadd.f32 %v694, %v702
      %v734 = vadd.f32 %v695, %v702
      %v735 = vadd.f32 %v696, %v702
      %v736 = vmax.f32 %v704, 0.0
      %v737 = vmax.f32 %v705, 0.0
      %v738 = vmax.f32 %v706, 0.0
      %v739 = vmax.f32 %v707, 0.0
      %v740 = vmax.f32 %v708, 0.0
      %v741 = vmax.f32 %v709, 0.0
      %v742 = vmax.f32 %v710, 0.0
      %v743 = vmax.f32 %v711, 0.0
      %v744 = vmax.f32 %v712, 0.0
      %v745 = vmax.f32 %v713, 0.0
      %v746 = vmax.f32 %v714, 0.0
      %v747 = vmax.f32 %v715, 0.0
      %v748 = vmax.f32 %v716, 0.0
      %v749 = vmax.f32 %v717, 0.0
      %v750 = vmax.f32 %v718, 0.0
      %v751 = vmax.f32 %v719, 0.0
      %v752 = vmax.f32 %v720, 0.0
      %v753 = vmax.f32 %v721, 0.0
      %v754 = vmax.f32 %v722, 0.0
      %v755 = vmax.f32 %v723, 0.0
      %v756 = vmax.f32 %v724, 0.0
      %v757 = vmax.f32 %v725, 0.0
      %v758 = vmax.f32 %v726, 0.0
      %v759 = vmax.f32 %v727, 0.0
      %v760 = vmax.f32 %v728, 0.0
      %v761 = vmax.f32 %v729, 0.0
      %v762 = vmax.f32 %v730, 0.0
      %v763 = vmax.f32 %v731, 0.0
      %v764 = vmax.f32 %v732, 0.0
      %v765 = vmax.f32 %v733, 0.0
      %v766 = vmax.f32 %v734, 0.0
      %v767 = vmax.f32 %v735, 0.0
      %v768 = vpack.c.bf16 %v737, %v736
      %v769 = vpack.c.bf16 %v739, %v738
      %v770 = vpack.c.bf16 %v741, %v740
      %v771 = vpack.c.bf16 %v743, %v742
      %v772 = vpack.c.bf16 %v745, %v744
      %v773 = vpack.c.bf16 %v747, %v746
      %v774 = vpack.c.bf16 %v749, %v748
      %v775 = vpack.c.bf16 %v751, %v750
      %v776 = vpack.c.bf16 %v753, %v752
      %v777 = vpack.c.bf16 %v755, %v754
      %v778 = vpack.c.bf16 %v757, %v756
      %v779 = vpack.c.bf16 %v759, %v758
      %v780 = vpack.c.bf16 %v761, %v760
      %v781 = vpack.c.bf16 %v763, %v762
      %v782 = vpack.c.bf16 %v765, %v764
      %v783 = vpack.c.bf16 %v767, %v766
      %v800 = vunpack.c.l.b16 %v768
      %v801 = vunpack.c.h.b16 %v768
      %v802 = vunpack.c.l.b16 %v769
      %v803 = vunpack.c.h.b16 %v769
      %v804 = vunpack.c.l.b16 %v770
      %v805 = vunpack.c.h.b16 %v770
      %v806 = vunpack.c.l.b16 %v771
      %v807 = vunpack.c.h.b16 %v771
      %v808 = vunpack.c.l.b16 %v772
      %v809 = vunpack.c.h.b16 %v772
      %v810 = vunpack.c.l.b16 %v773
      %v811 = vunpack.c.h.b16 %v773
      %v812 = vunpack.c.l.b16 %v774
      %v813 = vunpack.c.h.b16 %v774
      %v814 = vunpack.c.l.b16 %v775
      %v815 = vunpack.c.h.b16 %v775
      %v816 = vunpack.c.l.b16 %v776
      %v817 = vunpack.c.h.b16 %v776
      %v818 = vunpack.c.l.b16 %v777
      %v819 = vunpack.c.h.b16 %v777
      %v820 = vunpack.c.l.b16 %v778
      %v821 = vunpack.c.h.b16 %v778
      %v822 = vunpack.c.l.b16 %v779
      %v823 = vunpack.c.h.b16 %v779
      %v824 = vunpack.c.l.b16 %v780
      %v825 = vunpack.c.h.b16 %v780
      %v826 = vunpack.c.l.b16 %v781
      %v827 = vunpack.c.h.b16 %v781
      %v828 = vunpack.c.l.b16 %v782
      %v829 = vunpack.c.h.b16 %v782
      %v830 = vunpack.c.l.b16 %v783
      %v831 = vunpack.c.h.b16 %v783
      %v832 = vpack.c.b16 %v800, %v800
      %v833 = vpack.c.b16 %v801, %v801
      %v834 = vpack.c.b16 %v802, %v802
      %v835 = vpack.c.b16 %v803, %v803
      %v836 = vpack.c.b16 %v804, %v804
      %v837 = vpack.c.b16 %v805, %v805
      %v838 = vpack.c.b16 %v806, %v806
      %v839 = vpack.c.b16 %v807, %v807
      %v840 = vpack.c.b16 %v808, %v808
      %v841 = vpack.c.b16 %v809, %v809
      %v842 = vpack.c.b16 %v810, %v810
      %v843 = vpack.c.b16 %v811, %v811
      %v844 = vpack.c.b16 %v812, %v812
      %v845 = vpack.c.b16 %v813, %v813
      %v846 = vpack.c.b16 %v814, %v814
      %v847 = vpack.c.b16 %v815, %v815
      %v848 = vpack.c.b16 %v816, %v816
      %v849 = vpack.c.b16 %v817, %v817
      %v850 = vpack.c.b16 %v818, %v818
      %v851 = vpack.c.b16 %v819, %v819
      %v852 = vpack.c.b16 %v820, %v820
      %v853 = vpack.c.b16 %v821, %v821
      %v854 = vpack.c.b16 %v822, %v822
      %v855 = vpack.c.b16 %v823, %v823
      %v856 = vpack.c.b16 %v824, %v824
      %v857 = vpack.c.b16 %v825, %v825
      %v858 = vpack.c.b16 %v826, %v826
      %v859 = vpack.c.b16 %v827, %v827
      %v860 = vpack.c.b16 %v828, %v828
      %v861 = vpack.c.b16 %v829, %v829
      %v862 = vpack.c.b16 %v830, %v830
      %v863 = vpack.c.b16 %v831, %v831
      %896 = vst [vmem:[#allocation8] sm:$0xf] %v832
      %897 = vst [vmem:[#allocation8 + $0x4] sm:$0xf] %v833
      %898 = vst [vmem:[#allocation8 + $0x8] sm:$0xf] %v834
      %899 = vst [vmem:[#allocation8 + $0xc] sm:$0xf] %v835
      %900 = vst [vmem:[#allocation8 + $0x10] sm:$0xf] %v836
      %901 = vst [vmem:[#allocation8 + $0x14] sm:$0xf] %v837
      %902 = vst [vmem:[#allocation8 + $0x18] sm:$0xf] %v838
      %903 = vst [vmem:[#allocation8 + $0x1c] sm:$0xf] %v839
      %904 = vst [vmem:[#allocation8 + $0x20] sm:$0xf] %v840
      %905 = vst [vmem:[#allocation8 + $0x24] sm:$0xf] %v841
      %906 = vst [vmem:[#allocation8 + $0x28] sm:$0xf] %v842
      %907 = vst [vmem:[#allocation8 + $0x2c] sm:$0xf] %v843
      %908 = vst [vmem:[#allocation8 + $0x30] sm:$0xf] %v844
      %909 = vst [vmem:[#allocation8 + $0x34] sm:$0xf] %v845
      %910 = vst [vmem:[#allocation8 + $0x38] sm:$0xf] %v846
      %911 = vst [vmem:[#allocation8 + $0x3c] sm:$0xf] %v847
      %912 = vst [vmem:[#allocation8 + $0x40] sm:$0xf] %v848
      %913 = vst [vmem:[#allocation8 + $0x44] sm:$0xf] %v849
      %914 = vst [vmem:[#allocation8 + $0x48] sm:$0xf] %v850
      %915 = vst [vmem:[#allocation8 + $0x4c] sm:$0xf] %v851
      %916 = vst [vmem:[#allocation8 + $0x50] sm:$0xf] %v852
      %917 = vst [vmem:[#allocation8 + $0x54] sm:$0xf] %v853
      %918 = vst [vmem:[#allocation8 + $0x58] sm:$0xf] %v854
      %919 = vst [vmem:[#allocation8 + $0x5c] sm:$0xf] %v855
      %920 = vst [vmem:[#allocation8 + $0x60] sm:$0xf] %v856
      %921 = vst [vmem:[#allocation8 + $0x64] sm:$0xf] %v857
      %922 = vst [vmem:[#allocation8 + $0x68] sm:$0xf] %v858
      %923 = vst [vmem:[#allocation8 + $0x6c] sm:$0xf] %v859
      %924 = vst [vmem:[#allocation8 + $0x70] sm:$0xf] %v860
      %925 = vst [vmem:[#allocation8 + $0x74] sm:$0xf] %v861
      %926 = vst [vmem:[#allocation8 + $0x78] sm:$0xf] %v862
      %927 = vst [vmem:[#allocation8 + $0x7c] sm:$0xf] %v863
    $region29: #{tpu_custom_call.1} parent=1 // pred_fallthru
      _
    // Predicated region
    $region30: #{tpu_custom_call.1} parent=1 // pred_check
      _
    $region31: #{tpu_custom_call.1} parent=1 // pred_check_branch
      %929 = sbr.rel (0) target = $region33
    $region32: #{tpu_custom_call.1} parent=1 // pred_region
      %s931 = ssub.s32 2048, 2048
      %932 = vsyncadd [#allocation5], %s931
      %s933 = sshll.u32 [#allocation8], 4
      %s934 = int_to_ptr.vmem [resolvable:$true] %s933
      %939 = dma.vmem_to_hbm [thread:$0]  %s934, 2048, %s3, [#allocation5], 64, 64, 4
    $region33: #{tpu_custom_call.1} parent=1 // pred_fallthru
      _
    // Predicated region
    $region34: #{tpu_custom_call.1} parent=1 // pred_check
      _
    $region35: #{tpu_custom_call.1} parent=1 // pred_check_branch
      %941 = sbr.rel (0) target = $region37
    $region36: #{tpu_custom_call.1} parent=1 // pred_region
      %942 = dma.done [#allocation5], 2048
    $region37: #{tpu_custom_call.1} parent=1 // pred_fallthru
      _
    %943 = vsyncpa [#allocation4], 1
    %944 = vsyncpa [#allocation7], 1
    %945 = vsyncpa [#allocation5], 1

</llo_original>
